<compile_context>
chip_gen: v6e
topology: v6e:2x2x1
jax: 0.10.0
libtpu: 0.0.40
codegen_flags: <defaults>
</compile_context>

<pallas_src>
import functools

import jax
import jax.numpy as jnp
from jax.experimental import pallas as pl
from jax.experimental.pallas import tpu as pltpu


EPS = 1e-6

_TARGET_BLOCK_IO_BYTES = 2 * 1024 * 1024   # bytes actually DMA'd per grid step
_MAX_BLOCK_F32_ELEMS = 1 * 1024 * 1024     # cap on in-kernel f32 working set / temp
_VMEM_LIMIT_BYTES = 48 * 1024 * 1024       # safe on v5e/v6e (128 MiB) & v7x (64 MiB)


def _round_up(v, m):
    return -(-v // m) * m


def _layernorm_rowwise_kernel(x_ref, a_ref, b_ref, o_ref, *, d, d_pad):
    """Per-row LayerNorm. Used when d >= 128; if d was padded to d_pad (lane
    dense), the padded lanes (input zeros, a=b=0) are masked out of the var."""
    x = x_ref[...].astype(jnp.float32)            # (T, d_pad)
    a = a_ref[...]                                # (1, d_pad) pre-cast f32
    b = b_ref[...]
    mean = jnp.sum(x, axis=-1, keepdims=True) * jnp.float32(1.0 / d)
    xc = x - mean
    if d != d_pad:
        lane = jax.lax.broadcasted_iota(jnp.int32, (1, d_pad), 1)
        xc_sq = jnp.where(lane < d, xc * xc, jnp.float32(0.0))
    else:
        xc_sq = xc * xc
    var = jnp.sum(xc_sq, axis=-1, keepdims=True) * jnp.float32(
        1.0 / max(d - 1, 1))                      # unbiased (torch .std default)
    # stats are only (T,1) here -> exact reciprocal is cheap
    inv = pl.reciprocal(jnp.sqrt(var) + jnp.float32(EPS), approx=False)
    o_ref[...] = ((xc * inv) * a + b).astype(o_ref.dtype)


def _layernorm_folded_kernel(x_ref, a_ref, b_ref, pm_ref, pv_ref, o_ref):
    """g = 128//d logical rows packed per 128-lane row (lane-dense small-d path).

    pm_ref / pv_ref are block-diagonal (lw, lw) matrices with 1/d resp. 1/(d-1)
    folded in: x @ P gives, in every lane, the (scaled) sum over that lane's
    d-wide segment, i.e. segmented reduce + broadcast-back in one MXU op.
    TODO(synk): if bundle dumps on v5e show the f32-decomposed vmatmul binding,
    replace the two dots with a log2(d)-step roll+select butterfly on XLU/VPU."""
    x = x_ref[...].astype(jnp.float32)            # (T, lw)
    a = a_ref[...]                                # (1, lw)  a_2 tiled g times
    b = b_ref[...]
    mean = jnp.dot(x, pm_ref[...], preferred_element_type=jnp.float32)
    xc = x - mean
    var = jnp.dot(xc * xc, pv_ref[...], preferred_element_type=jnp.float32)
    denom = jnp.sqrt(var) + jnp.float32(EPS)
    # approx reciprocal (single EUP pass) + one Newton step on the VPU:
    # rel error ~2^-24, far inside the 1e-4 tolerance.
    inv = pl.reciprocal(denom, approx=True)
    inv = inv * (jnp.float32(2.0) - denom * inv)
    o_ref[...] = ((xc * inv) * a + b).astype(o_ref.dtype)


def _pick_row_tile(n_rows, lane_width, io_itemsize):
    # sublane packing multiple per I/O dtype (f32:8, bf16:16, int8/fp8:32)
    sublane = {4: 8, 2: 16, 1: 32}.get(int(io_itemsize), 8)
    if n_rows <= sublane:
        return int(n_rows)                        # single full-extent block
    rt_io = _TARGET_BLOCK_IO_BYTES // (lane_width * io_itemsize)
    rt_f32 = _MAX_BLOCK_F32_ELEMS // lane_width
    rt = max(sublane, min(rt_io, rt_f32))
    # keep >= ~8 grid steps when there is enough work so the "parallel" axis
    # shards across both v7x TensorCores and the pipeline has steps to overlap
    rt = min(rt, max(sublane, n_rows // 8))
    rt = max(sublane, (rt // sublane) * sublane)
    # nudge the step count even (v7x: 2 TCs share the parallel axis)
    steps = -(-n_rows // rt)
    if steps > 2 and steps % 2 == 1:
        rt_even = _round_up(-(-n_rows // (steps + 1)), sublane)
        if rt_even >= sublane and (-(-n_rows // rt_even)) % 2 == 0:
            rt = rt_even
    return int(rt)


@jax.jit
def pallas_layernorm(x, a_2, b_2):
    """LayerNorm over the last axis of x (any leading shape), PyTorch semantics."""
    orig_shape = x.shape
    d = int(orig_shape[-1])
    rows = 1
    for s in orig_shape[:-1]:
        rows *= int(s)

    io_dtype = x.dtype
    itemsize = jnp.dtype(io_dtype).itemsize
    inv_nm1 = jnp.float32(1.0 / max(d - 1, 1))    # NB: d==1 -> b_2 (torch gives NaN)

    x2 = x.reshape(rows, d)
    a32 = a_2.astype(jnp.float32).reshape(1, d)
    b32 = b_2.astype(jnp.float32).reshape(1, d)

    params = pltpu.CompilerParams(dimension_semantics=("parallel",),
                                  vmem_limit_bytes=_VMEM_LIMIT_BYTES)

    if 128 % d == 0 and d % 128 != 0:
        # ---------------- folded lane-dense path (small d) ----------------
        g = 128 // d
        lw = 128
        rows_f = -(-rows // g)
        if rows_f * g != rows:
            # tiny (< g rows) pad, only needed so the fold reshape is legal
            x2 = jnp.pad(x2, ((0, rows_f * g - rows), (0, 0)))
        xf = x2.reshape(rows_f, lw)

        a_f = jnp.tile(a32, (1, g))
        b_f = jnp.tile(b32, (1, g))
        # block-diagonal segment matrices with the 1/d, 1/(d-1) scalars folded in
        seg = jnp.arange(lw, dtype=jnp.int32) // d
        blk = (seg[:, None] == seg[None, :]).astype(jnp.float32)
        p_mean = blk * jnp.float32(1.0 / d)
        p_var = blk * inv_nm1

        row_tile = _pick_row_tile(rows_f, lw, itemsize)
        grid = (pl.cdiv(rows_f, row_tile),)
        out = pl.pallas_call(
            _layernorm_folded_kernel,
            out_shape=jax.ShapeDtypeStruct((rows_f, lw), io_dtype),
            grid=grid,
            in_specs=[
                pl.BlockSpec((row_tile, lw), lambda i: (i, 0)),
                pl.BlockSpec((1, lw), lambda i: (0, 0)),
                pl.BlockSpec((1, lw), lambda i: (0, 0)),
                pl.BlockSpec((lw, lw), lambda i: (0, 0)),
                pl.BlockSpec((lw, lw), lambda i: (0, 0)),
            ],
            out_specs=pl.BlockSpec((row_tile, lw), lambda i: (i, 0)),
            compiler_params=params,
            cost_estimate=pl.CostEstimate(
                flops=int(4 * rows_f * lw * lw + 8 * rows_f * lw),
                transcendentals=int(2 * rows_f * lw),
                bytes_accessed=int(2 * rows_f * lw * itemsize)),
        )(xf, a_f, b_f, p_mean, p_var)

        out = out.reshape(rows_f * g, d)
        if rows_f * g != rows:
            out = out[:rows]
        return out.reshape(orig_shape)

    # ------------- per-row path (d >= 128); pad features if awkward -------------
    d_pad = _round_up(d, 128)
    if d_pad != d:
        # One host-side feature pad + output slice, traded for fully lane-dense
        # (unmasked vst) loads/stores inside the kernel.
        x2 = jnp.pad(x2, ((0, 0), (0, d_pad - d)))
        a32 = jnp.pad(a32, ((0, 0), (0, d_pad - d)))
        b32 = jnp.pad(b32, ((0, 0), (0, d_pad - d)))

    row_tile = _pick_row_tile(rows, d_pad, itemsize)
    grid = (pl.cdiv(rows, row_tile),)
    out = pl.pallas_call(
        functools.partial(_layernorm_rowwise_kernel, d=d, d_pad=d_pad),
        out_shape=jax.ShapeDtypeStruct((rows, d_pad), io_dtype),
        grid=grid,
        in_specs=[
            pl.BlockSpec((row_tile, d_pad), lambda i: (i, 0)),
            pl.BlockSpec((1, d_pad), lambda i: (0, 0)),
            pl.BlockSpec((1, d_pad), lambda i: (0, 0)),
        ],
        out_specs=pl.BlockSpec((row_tile, d_pad), lambda i: (i, 0)),
        compiler_params=params,
        cost_estimate=pl.CostEstimate(
            flops=int(10 * rows * d_pad),
            transcendentals=int(2 * rows),
            bytes_accessed=int(2 * rows * d_pad * itemsize)),
    )(x2, a32, b32)

    if d_pad != d:
        out = out[:, :d]
    return out.reshape(orig_shape)


def decoder_forward(x, memory_att, memory_attr, memory_rela,
                    mask_att, mask_attr, mask_rela, tgt_mask,
                    *, n_layers, a_2, b_2):
    """Mirrors Decoder.forward: N layers, then LayerNorm."""
    for _ in range(n_layers):
        # TODO(synk): the per-layer module (`layer` passed to Decoder.__init__)
        # is not defined in the provided source, so it is applied as identity.
        x = x
    return pallas_layernorm(x, a_2, b_2)


if __name__ == "__main__":
    key = jax.random.PRNGKey(0)
    batch, seq, d_model = 2, 8, 32
    mem_len = 8
    n_layers = 2

    k_x, k_ma, k_mb, k_mc = jax.random.split(key, 4)
    x = jax.random.normal(k_x, (batch, seq, d_model), dtype=jnp.float32)
    memory_att = jax.random.normal(k_ma, (batch, mem_len, d_model), dtype=jnp.float32)
    memory_attr = jax.random.normal(k_mb, (batch, mem_len, d_model), dtype=jnp.float32)
    memory_rela = jax.random.normal(k_mc, (batch, mem_len, d_model), dtype=jnp.float32)
    mask_att = jnp.ones((batch, 1, mem_len), dtype=jnp.float32)
    mask_attr = jnp.ones((batch, 1, mem_len), dtype=jnp.float32)
    mask_rela = jnp.ones((batch, 1, mem_len), dtype=jnp.float32)
    tgt_mask = jnp.tril(jnp.ones((seq, seq), dtype=jnp.float32))[None, :, :]

    # Decoder.norm = LayerNorm(layer.size): a_2 init to ones, b_2 to zeros.
    a_2 = jnp.ones((d_model,), dtype=jnp.float32)
    b_2 = jnp.zeros((d_model,), dtype=jnp.float32)

    out = decoder_forward(
        x, memory_att, memory_attr, memory_rela,
        mask_att, mask_attr, mask_rela, tgt_mask,
        n_layers=n_layers, a_2=a_2, b_2=b_2,
    )
    out = jax.block_until_ready(out)

    # Cross-check against a plain-JAX reference of the PyTorch math.
    mean = jnp.mean(x, axis=-1, keepdims=True)
    std = jnp.std(x, axis=-1, keepdims=True, ddof=1)
    ref = a_2 * (x - mean) / (std + EPS) + b_2
    assert out.shape == x.shape
    assert jnp.max(jnp.abs(out - ref)) < 1e-4

    print("KERNEL_OK")
</pallas_src>

<mosaic_0001>
module attributes {stable_mosaic.version = 11 : i64} {
  func.func @_layernorm_folded_kernel(%arg0: i32, %arg1: memref<4x128xf32, #tpu.memory_space<vmem>>, %arg2: memref<1x128xf32, #tpu.memory_space<vmem>>, %arg3: memref<1x128xf32, #tpu.memory_space<vmem>>, %arg4: memref<128x128xf32, #tpu.memory_space<vmem>>, %arg5: memref<128x128xf32, #tpu.memory_space<vmem>>, %arg6: memref<4x128xf32, #tpu.memory_space<vmem>>) attributes {dimension_semantics = [#tpu.dimension_semantics<parallel>], iteration_bounds = array<i64: 1>, scalar_prefetch = 0 : i64, scratch_operands = 0 : i64, tpu.core_type = #tpu.core_type<tc>, window_params = [{transform_indices = @transform_0, window_bounds = array<i64: 4, 128>}, {pipeline_mode = #tpu.pipeline_mode<synchronous>, transform_indices = @transform_1, window_bounds = array<i64: 1, 128>}, {pipeline_mode = #tpu.pipeline_mode<synchronous>, transform_indices = @transform_2, window_bounds = array<i64: 1, 128>}, {pipeline_mode = #tpu.pipeline_mode<synchronous>, transform_indices = @transform_3, window_bounds = array<i64: 128, 128>}, {pipeline_mode = #tpu.pipeline_mode<synchronous>, transform_indices = @transform_4, window_bounds = array<i64: 128, 128>}, {transform_indices = @transform_5, window_bounds = array<i64: 4, 128>}]} {
    %c0 = arith.constant 0 : index
    %c0_0 = arith.constant 0 : index
    %0 = vector.load %arg1[%c0, %c0_0] : memref<4x128xf32, #tpu.memory_space<vmem>>, vector<4x128xf32>
    %c0_1 = arith.constant 0 : index
    %c0_2 = arith.constant 0 : index
    %1 = vector.load %arg2[%c0_1, %c0_2] : memref<1x128xf32, #tpu.memory_space<vmem>>, vector<1x128xf32>
    %c0_3 = arith.constant 0 : index
    %c0_4 = arith.constant 0 : index
    %2 = vector.load %arg3[%c0_3, %c0_4] : memref<1x128xf32, #tpu.memory_space<vmem>>, vector<1x128xf32>
    %c0_5 = arith.constant 0 : index
    %c0_6 = arith.constant 0 : index
    %3 = vector.load %arg4[%c0_5, %c0_6] : memref<128x128xf32, #tpu.memory_space<vmem>>, vector<128x128xf32>
    %cst = arith.constant dense<0.000000e+00> : vector<4x128xf32>
    %4 = tpu.matmul %0, %3, %cst {dimension_numbers = #tpu.dot_dimension_numbers<[1], [0], [0], [1], [0, 0, 1, 1], [], []>} : vector<4x128xf32>, vector<128x128xf32>, vector<4x128xf32> -> vector<4x128xf32>
    %5 = arith.subf %0, %4 : vector<4x128xf32>
    %6 = arith.mulf %5, %5 : vector<4x128xf32>
    %c0_7 = arith.constant 0 : index
    %c0_8 = arith.constant 0 : index
    %7 = vector.load %arg5[%c0_7, %c0_8] : memref<128x128xf32, #tpu.memory_space<vmem>>, vector<128x128xf32>
    %cst_9 = arith.constant dense<0.000000e+00> : vector<4x128xf32>
    %8 = tpu.matmul %6, %7, %cst_9 {dimension_numbers = #tpu.dot_dimension_numbers<[1], [0], [0], [1], [0, 0, 1, 1], [], []>} : vector<4x128xf32>, vector<128x128xf32>, vector<4x128xf32> -> vector<4x128xf32>
    %9 = math.sqrt %8 : vector<4x128xf32>
    %cst_10 = arith.constant 9.99999997E-7 : f32
    %10 = vector.broadcast %cst_10 : f32 to vector<4x128xf32>
    %11 = arith.addf %9, %10 : vector<4x128xf32>
    %12 = tpu.reciprocal %11 {approx = true} : vector<4x128xf32> -> vector<4x128xf32>
    %13 = arith.mulf %11, %12 : vector<4x128xf32>
    %cst_11 = arith.constant 2.000000e+00 : f32
    %14 = vector.broadcast %cst_11 : f32 to vector<4x128xf32>
    %15 = arith.subf %14, %13 : vector<4x128xf32>
    %16 = arith.mulf %12, %15 : vector<4x128xf32>
    %17 = arith.mulf %5, %16 : vector<4x128xf32>
    %18 = vector.broadcast %1 : vector<1x128xf32> to vector<4x128xf32>
    %19 = arith.mulf %17, %18 : vector<4x128xf32>
    %20 = vector.broadcast %2 : vector<1x128xf32> to vector<4x128xf32>
    %21 = arith.addf %19, %20 : vector<4x128xf32>
    %c0_12 = arith.constant 0 : index
    %c0_13 = arith.constant 0 : index
    %22 = vector.load %arg6[%c0_12, %c0_13] : memref<4x128xf32, #tpu.memory_space<vmem>>, vector<4x128xf32>
    tpu.vector_store %arg6[%c0_12, %c0_13], %21 {strides = array<i32>} : memref<4x128xf32, #tpu.memory_space<vmem>>, vector<4x128xf32>,
    return
  }
  func.func @transform_0(%arg0: i32) -> (i32, i32) {
    %c0_i32 = arith.constant 0 : i32
    %c0_i32_0 = arith.constant 0 : i32
    return %arg0, %c0_i32 : i32, i32
  }
  func.func @transform_1(%arg0: i32) -> (i32, i32) {
    %c0_i32 = arith.constant 0 : i32
    %c0_i32_0 = arith.constant 0 : i32
    %c0_i32_1 = arith.constant 0 : i32
    return %c0_i32, %c0_i32_0 : i32, i32
  }
  func.func @transform_2(%arg0: i32) -> (i32, i32) {
    %c0_i32 = arith.constant 0 : i32
    %c0_i32_0 = arith.constant 0 : i32
    %c0_i32_1 = arith.constant 0 : i32
    return %c0_i32, %c0_i32_0 : i32, i32
  }
  func.func @transform_3(%arg0: i32) -> (i32, i32) {
    %c0_i32 = arith.constant 0 : i32
    %c0_i32_0 = arith.constant 0 : i32
    %c0_i32_1 = arith.constant 0 : i32
    return %c0_i32, %c0_i32_0 : i32, i32
  }
  func.func @transform_4(%arg0: i32) -> (i32, i32) {
    %c0_i32 = arith.constant 0 : i32
    %c0_i32_0 = arith.constant 0 : i32
    %c0_i32_1 = arith.constant 0 : i32
    return %c0_i32, %c0_i32_0 : i32, i32
  }
  func.func @transform_5(%arg0: i32) -> (i32, i32) {
    %c0_i32 = arith.constant 0 : i32
    %c0_i32_0 = arith.constant 0 : i32
    return %arg0, %c0_i32 : i32, i32
  }
}

</mosaic_0001>

<llo_original>
// kernel: pallas_layernorm.1
$region0: #{pallas_layernorm.1}
  #allocation0 [shape = 'u32[]', space=smem, size = 0x4, offset = 0x4, fixed_abs, tag = 'smem constant byte address 0x4 - core index']
  #allocation1 [shape = 'u32[144,128]{1,0:T(1,128)}', space=vmem, size = 0x12000, scoped, tag = 'internal scratch']
  %s0 = inlined_call_operand.vmem [shape: f32[4,128], index: 0, kind: input, shape index: {}]
  %s1 = inlined_call_operand.vmem [shape: f32[1,128], index: 1, kind: input, shape index: {}]
  %s2 = inlined_call_operand.vmem [shape: f32[1,128], index: 2, kind: input, shape index: {}]
  %s3 = inlined_call_operand.vmem [shape: f32[128,128], index: 3, kind: input, shape index: {}]
  %s4 = inlined_call_operand.vmem [shape: f32[128,128], index: 4, kind: input, shape index: {}]
  %s5 = inlined_call_operand.vmem [shape: f32[4,128], index: 5, kind: output, shape index: {}]
  %s6 = sld [smem:[#allocation0]]
  $region30: #{pallas_layernorm.1} parent=0
    _
  %s8 = ssub.s32 1, %s6
  %s9 = scalar_select 0, %s8, %s6
  // Predicated region
  $region2: #{pallas_layernorm.1} parent=0 // pred_check
    _
  $region3: #{pallas_layernorm.1} parent=0 // pred_check_branch
    %11 = sbr.rel (0) target = $region5
  $region4: #{pallas_layernorm.1} parent=0 // pred_region
    _
  $region5: #{pallas_layernorm.1} parent=0 // pred_fallthru
    _
  // Predicated region
  $region6: #{pallas_layernorm.1} parent=0 // pred_check
    _
  $region7: #{pallas_layernorm.1} parent=0 // pred_check_branch
    %13 = sbr.rel (0) target = $region9
  $region8: #{pallas_layernorm.1} parent=0 // pred_region
    _
  $region9: #{pallas_layernorm.1} parent=0 // pred_fallthru
    _
  // Predicated region
  $region10: #{pallas_layernorm.1} parent=0 // pred_check
    _
  $region11: #{pallas_layernorm.1} parent=0 // pred_check_branch
    %15 = sbr.rel (0) target = $region13
  $region12: #{pallas_layernorm.1} parent=0 // pred_region
    _
  $region13: #{pallas_layernorm.1} parent=0 // pred_fallthru
    _
  // Predicated region
  $region14: #{pallas_layernorm.1} parent=0 // pred_check
    _
  $region15: #{pallas_layernorm.1} parent=0 // pred_check_branch
    %17 = sbr.rel (0) target = $region17
  $region16: #{pallas_layernorm.1} parent=0 // pred_region
    _
  $region17: #{pallas_layernorm.1} parent=0 // pred_fallthru
    _
  // Predicated region
  $region18: #{pallas_layernorm.1} parent=0 // pred_check
    _
  $region19: #{pallas_layernorm.1} parent=0 // pred_check_branch
    %19 = sbr.rel (0) target = $region21
  $region20: #{pallas_layernorm.1} parent=0 // pred_region
    _
  $region21: #{pallas_layernorm.1} parent=0 // pred_fallthru
    _
  %v20 = vld [vmem:[%s0] sm:$0xf]
  %v21 = vld [vmem:[%s1] sm:$0x1]
  %v22 = vld [vmem:[%s2] sm:$0x1]
  %v23 = vld [vmem:[%s3] sm:$0xff]
  %v24 = vld [vmem:[%s3 + $0x8] sm:$0xff]
  %v25 = vld [vmem:[%s3 + $0x10] sm:$0xff]
  %v26 = vld [vmem:[%s3 + $0x18] sm:$0xff]
  %v27 = vld [vmem:[%s3 + $0x20] sm:$0xff]
  %v28 = vld [vmem:[%s3 + $0x28] sm:$0xff]
  %v29 = vld [vmem:[%s3 + $0x30] sm:$0xff]
  %v30 = vld [vmem:[%s3 + $0x38] sm:$0xff]
  %v31 = vld [vmem:[%s3 + $0x40] sm:$0xff]
  %v32 = vld [vmem:[%s3 + $0x48] sm:$0xff]
  %v33 = vld [vmem:[%s3 + $0x50] sm:$0xff]
  %v34 = vld [vmem:[%s3 + $0x58] sm:$0xff]
  %v35 = vld [vmem:[%s3 + $0x60] sm:$0xff]
  %v36 = vld [vmem:[%s3 + $0x68] sm:$0xff]
  %v37 = vld [vmem:[%s3 + $0x70] sm:$0xff]
  %v38 = vld [vmem:[%s3 + $0x78] sm:$0xff]
  %39 = vmatprep.subr.mxu0 0.0
  %40 = vmatpush1.msra.mxu0 %v38
  %41 = vmatprep.subr.mxu0 0.0
  %42 = vmatpush1.msra.mxu0 %v37
  %43 = vmatprep.subr.mxu0 0.0
  %44 = vmatpush1.msra.mxu0 %v36
  %45 = vmatprep.subr.mxu0 0.0
  %46 = vmatpush1.msra.mxu0 %v35
  %47 = vmatprep.subr.mxu0 0.0
  %48 = vmatpush1.msra.mxu0 %v34
  %49 = vmatprep.subr.mxu0 0.0
  %50 = vmatpush1.msra.mxu0 %v33
  %51 = vmatprep.subr.mxu0 0.0
  %52 = vmatpush1.msra.mxu0 %v32
  %53 = vmatprep.subr.mxu0 0.0
  %54 = vmatpush1.msra.mxu0 %v31
  %55 = vmatprep.subr.mxu0 0.0
  %56 = vmatpush1.msra.mxu0 %v30
  %57 = vmatprep.subr.mxu0 0.0
  %58 = vmatpush1.msra.mxu0 %v29
  %59 = vmatprep.subr.mxu0 0.0
  %60 = vmatpush1.msra.mxu0 %v28
  %61 = vmatprep.subr.mxu0 0.0
  %62 = vmatpush1.msra.mxu0 %v27
  %63 = vmatprep.subr.mxu0 0.0
  %64 = vmatpush1.msra.mxu0 %v26
  %65 = vmatprep.subr.mxu0 0.0
  %66 = vmatpush1.msra.mxu0 %v25
  %67 = vmatprep.subr.mxu0 0.0
  %68 = vmatpush1.msra.mxu0 %v24
  %69 = vmatprep.subr.mxu0 0.0
  %70 = vmatpush1.msra.mxu0 %v23
  %71 = vmatprep.subr.mxu0 0.0
  %72 = vmatpush2.msra.mxu0 0.0
  %73 = vmatprep.subr.mxu0 0.0
  %74 = vmatpush2.msra.mxu0 0.0
  %75 = vmatprep.subr.mxu0 0.0
  %76 = vmatpush2.msra.mxu0 0.0
  %77 = vmatprep.subr.mxu0 0.0
  %78 = vmatpush2.msra.mxu0 0.0
  %79 = vmatprep.subr.mxu0 0.0
  %80 = vmatpush2.msra.mxu0 0.0
  %81 = vmatprep.subr.mxu0 0.0
  %82 = vmatpush2.msra.mxu0 0.0
  %83 = vmatprep.subr.mxu0 0.0
  %84 = vmatpush2.msra.mxu0 0.0
  %85 = vmatprep.subr.mxu0 0.0
  %86 = vmatpush2.msra.mxu0 0.0
  %87 = vmatprep.subr.mxu0 0.0
  %88 = vmatpush2.msra.mxu0 0.0
  %89 = vmatprep.subr.mxu0 0.0
  %90 = vmatpush2.msra.mxu0 0.0
  %91 = vmatprep.subr.mxu0 0.0
  %92 = vmatpush2.msra.mxu0 0.0
  %93 = vmatprep.subr.mxu0 0.0
  %94 = vmatpush2.msra.mxu0 0.0
  %95 = vmatprep.subr.mxu0 0.0
  %96 = vmatpush2.msra.mxu0 0.0
  %97 = vmatprep.subr.mxu0 0.0
  %98 = vmatpush2.msra.mxu0 0.0
  %99 = vmatprep.subr.mxu0 0.0
  %100 = vmatpush2.msra.mxu0 0.0
  %101 = vmatprep.subr.mxu0 0.0
  %102 = vmatpush2.msra.mxu0 0.0
  %103 = vmatprep.mubr.f32.mxu0 0.0
  %104 = vmatmul.mubr.f32.gmra.mxu0 %v20
  %v105 = vpop.f32.mrf.mxu0
  %v106 = vadd.f32 0.0, %v105
  %v107 = vpop.f32.mrf.mxu0
  %108 = vdwg.mxu0
  %v109 = vsub.f32 %v20, %v106
  %v110 = vmul.f32 %v109, %v109
  %v111 = vld [vmem:[%s4] sm:$0xff]
  %v112 = vld [vmem:[%s4 + $0x8] sm:$0xff]
  %v113 = vld [vmem:[%s4 + $0x10] sm:$0xff]
  %v114 = vld [vmem:[%s4 + $0x18] sm:$0xff]
  %v115 = vld [vmem:[%s4 + $0x20] sm:$0xff]
  %v116 = vld [vmem:[%s4 + $0x28] sm:$0xff]
  %v117 = vld [vmem:[%s4 + $0x30] sm:$0xff]
  %v118 = vld [vmem:[%s4 + $0x38] sm:$0xff]
  %v119 = vld [vmem:[%s4 + $0x40] sm:$0xff]
  %v120 = vld [vmem:[%s4 + $0x48] sm:$0xff]
  %v121 = vld [vmem:[%s4 + $0x50] sm:$0xff]
  %v122 = vld [vmem:[%s4 + $0x58] sm:$0xff]
  %v123 = vld [vmem:[%s4 + $0x60] sm:$0xff]
  %v124 = vld [vmem:[%s4 + $0x68] sm:$0xff]
  %v125 = vld [vmem:[%s4 + $0x70] sm:$0xff]
  %v126 = vld [vmem:[%s4 + $0x78] sm:$0xff]
  %127 = vmatprep.subr.mxu0 0.0
  %128 = vmatpush1.msra.mxu0 %v126
  %129 = vmatprep.subr.mxu0 0.0
  %130 = vmatpush1.msra.mxu0 %v125
  %131 = vmatprep.subr.mxu0 0.0
  %132 = vmatpush1.msra.mxu0 %v124
  %133 = vmatprep.subr.mxu0 0.0
  %134 = vmatpush1.msra.mxu0 %v123
  %135 = vmatprep.subr.mxu0 0.0
  %136 = vmatpush1.msra.mxu0 %v122
  %137 = vmatprep.subr.mxu0 0.0
  %138 = vmatpush1.msra.mxu0 %v121
  %139 = vmatprep.subr.mxu0 0.0
  %140 = vmatpush1.msra.mxu0 %v120
  %141 = vmatprep.subr.mxu0 0.0
  %142 = vmatpush1.msra.mxu0 %v119
  %143 = vmatprep.subr.mxu0 0.0
  %144 = vmatpush1.msra.mxu0 %v118
  %145 = vmatprep.subr.mxu0 0.0
  %146 = vmatpush1.msra.mxu0 %v117
  %147 = vmatprep.subr.mxu0 0.0
  %148 = vmatpush1.msra.mxu0 %v116
  %149 = vmatprep.subr.mxu0 0.0
  %150 = vmatpush1.msra.mxu0 %v115
  %151 = vmatprep.subr.mxu0 0.0
  %152 = vmatpush1.msra.mxu0 %v114
  %153 = vmatprep.subr.mxu0 0.0
  %154 = vmatpush1.msra.mxu0 %v113
  %155 = vmatprep.subr.mxu0 0.0
  %156 = vmatpush1.msra.mxu0 %v112
  %157 = vmatprep.subr.mxu0 0.0
  %158 = vmatpush1.msra.mxu0 %v111
  %159 = vmatprep.subr.mxu0 0.0
  %160 = vmatpush2.msra.mxu0 0.0
  %161 = vmatprep.subr.mxu0 0.0
  %162 = vmatpush2.msra.mxu0 0.0
  %163 = vmatprep.subr.mxu0 0.0
  %164 = vmatpush2.msra.mxu0 0.0
  %165 = vmatprep.subr.mxu0 0.0
  %166 = vmatpush2.msra.mxu0 0.0
  %167 = vmatprep.subr.mxu0 0.0
  %168 = vmatpush2.msra.mxu0 0.0
  %169 = vmatprep.subr.mxu0 0.0
  %170 = vmatpush2.msra.mxu0 0.0
  %171 = vmatprep.subr.mxu0 0.0
  %172 = vmatpush2.msra.mxu0 0.0
  %173 = vmatprep.subr.mxu0 0.0
  %174 = vmatpush2.msra.mxu0 0.0
  %175 = vmatprep.subr.mxu0 0.0
  %176 = vmatpush2.msra.mxu0 0.0
  %177 = vmatprep.subr.mxu0 0.0
  %178 = vmatpush2.msra.mxu0 0.0
  %179 = vmatprep.subr.mxu0 0.0
  %180 = vmatpush2.msra.mxu0 0.0
  %181 = vmatprep.subr.mxu0 0.0
  %182 = vmatpush2.msra.mxu0 0.0
  %183 = vmatprep.subr.mxu0 0.0
  %184 = vmatpush2.msra.mxu0 0.0
  %185 = vmatprep.subr.mxu0 0.0
  %186 = vmatpush2.msra.mxu0 0.0
  %187 = vmatprep.subr.mxu0 0.0
  %188 = vmatpush2.msra.mxu0 0.0
  %189 = vmatprep.subr.mxu0 0.0
  %190 = vmatpush2.msra.mxu0 0.0
  %191 = vmatprep.mubr.f32.mxu0 0.0
  %192 = vmatmul.mubr.f32.gmra.mxu0 %v110
  %v193 = vpop.f32.mrf.mxu0
  %v194 = vadd.f32 0.0, %v193
  %v195 = vpop.f32.mrf.mxu0
  %196 = vdwg.mxu0
  %v197 = vrsqrt.pop %v194
  %v198 = vmul.f32 %v194, %v197
  %vm199 = vcmp.eq.f32.partialorder %v194, inf
  %v200 = vsel %vm199, %v194, %v198
  %vm201 = vcmp.eq.f32.partialorder %v194, 0.0
  %v202 = vand.u32 %v194, 2147483648
  %v203 = vsel %vm201, %v202, %v200
  %v204 = vadd.f32 %v203, 1e-06
  %v205 = vrcp.pop %v204
  %v206 = vmul.f32 %v204, %v205
  %v207 = vsub.f32 2.0, %v206
  %v208 = vmul.f32 %v205, %v207
  %v209 = vmul.f32 %v109, %v208
  %v211 = vlaneseq
  %v212 = vshrl.u32 %v211, 7
  %v213 = vsub.s32 0, %v212
  %v214 = vrot.slane %v21, %v213
  %v216 = vmul.f32 %v209, %v214
  %v218 = vlaneseq
  %v219 = vshrl.u32 %v218, 7
  %v220 = vsub.s32 0, %v219
  %v221 = vrot.slane %v22, %v220
  %v223 = vadd.f32 %v216, %v221
  %224 = vst [vmem:[%s5] sm:$0xf] %v223
  // Predicated region
  $region22: #{pallas_layernorm.1} parent=0 // pred_check
    _
  $region23: #{pallas_layernorm.1} parent=0 // pred_check_branch
    %226 = sbr.rel (0) target = $region25
  $region24: #{pallas_layernorm.1} parent=0 // pred_region
    _
  $region25: #{pallas_layernorm.1} parent=0 // pred_fallthru
    _
  // Predicated region
  $region26: #{pallas_layernorm.1} parent=0 // pred_check
    _
  $region27: #{pallas_layernorm.1} parent=0 // pred_check_branch
    %228 = sbr.rel (0) target = $region29
  $region28: #{pallas_layernorm.1} parent=0 // pred_region
    _
  $region29: #{pallas_layernorm.1} parent=0 // pred_fallthru
    _

</llo_original>
